<compile_context>
chip_gen: v7x
topology: tpu7x:2x2x1
jax: 0.10.0
libtpu: 0.0.40
codegen_flags: <defaults>
</compile_context>

<pallas_src>
import math

import jax
import jax.numpy as jnp
from jax.experimental import pallas as pl
from jax.experimental.pallas import tpu as pltpu


def _round_up(x, m):
    return ((x + m - 1) // m) * m


def _disc_kernel(wcd_ref, b_ref, hpl_ref, hmi_ref, out_ref):
    # wcd_ref: (D, f)       VMEM, resident across grid steps (block-diag W @ c)
    # b_ref  : (1,)         SMEM, Bilinear bias
    # hpl_ref: (tile, D)    VMEM, streamed positive embeddings (rows folded into lanes)
    # hmi_ref: (tile, D)    VMEM, streamed negative embeddings
    # out_ref: (2, f, tile) VMEM out, lane-dense transposed scores
    wcd = wcd_ref[...]
    b = b_ref[0]
    s1 = jnp.dot(hpl_ref[...], wcd, preferred_element_type=jnp.float32) + b  # (tile, f)
    s2 = jnp.dot(hmi_ref[...], wcd, preferred_element_type=jnp.float32) + b  # (tile, f)
    # Transpose the tiny score tiles so the output stores are lane-dense
    # (unmasked full-lane vst); cheap XLU work, hidden under the streaming DMAs.
    out_ref[0] = s1.T.astype(out_ref.dtype)   # (f, tile)
    out_ref[1] = s2.T.astype(out_ref.dtype)   # (f, tile)


def discriminator_forward(c, h_pl, h_mi, weight, bias,
                          s_bias1=None, s_bias2=None,
                          target_block_bytes=4 * 2**20):
    """c: (n_h,), h_pl/h_mi: (N, n_h), weight: (1, n_h, n_h), bias: (1,).
    Returns logits of shape (2N,), matching torch.cat((sc_1, sc_2))."""
    N, n_h = h_pl.shape
    assert h_mi.shape == (N, n_h)
    dtype = h_pl.dtype
    itemsize = jnp.dtype(dtype).itemsize

    # Hoist the tiny bilinear contraction out of the kernel: wc = W[0] @ c (f32).
    wc = jnp.dot(weight.reshape(n_h, n_h).astype(jnp.float32),
                 c.reshape(n_h).astype(jnp.float32))            # (n_h,)

    # Lane folding: pack f consecutive rows into one 128-lane row when n_h < 128.
    if n_h < 128 and 128 % n_h == 0 and N % (128 // n_h) == 0:
        f = 128 // n_h
    else:
        f = 1
    Nf = N // f
    D = f * n_h
    hp = h_pl.reshape(Nf, D)           # free row-major reshape (bitcast)
    hm = h_mi.reshape(Nf, D)
    if f > 1:
        # block-diagonal wc: column j holds wc in rows [j*n_h, (j+1)*n_h)
        wcd = jnp.kron(jnp.eye(f, dtype=jnp.float32), wc.reshape(n_h, 1))   # (D, f)
    else:
        wcd = wc.reshape(n_h, 1)
    wcd = wcd.astype(dtype)            # stream-dtype (bf16 inputs keep bf16 weights)
    b = bias.reshape(1).astype(jnp.float32)

    # Byte-targeted row tile (lane-padded accounting); multiple of 128 rows so the
    # transposed output block is lane-dense; clamp so the grid has >= ~4 steps.
    row_bytes = _round_up(D, 128) * itemsize
    if Nf <= 128:
        tile = Nf
    else:
        tile = max(128, (target_block_bytes // row_bytes) // 128 * 128)
        tile = min(tile, _round_up(pl.cdiv(Nf, 4), 128))
        tile = max(tile, 128)
    grid = (pl.cdiv(Nf, tile),)        # ragged last block handled by Pallas, no pad

    # VMEM budget with lane/sublane padding accounted for; safe on v7x's 64 MiB.
    block_in_bytes = tile * _round_up(D, 128) * itemsize
    block_out_bytes = 2 * _round_up(f, 8) * _round_up(tile, 128) * 4
    wcd_bytes = _round_up(D, 8) * 128 * itemsize
    footprint = 2 * 2 * block_in_bytes + 2 * block_out_bytes + 2 * wcd_bytes
    vmem_limit = int(min(48 * 2**20, max(32 * 2**20, footprint + (4 << 20))))

    cost = pl.CostEstimate(
        flops=4 * N * n_h,                                   # 2 matvecs, 2 flops/MAC
        transcendentals=0,
        bytes_accessed=(2 * N * n_h * itemsize               # H streams (unpadded)
                        + 2 * N * 4                          # score outputs
                        + D * f * itemsize + 4),             # wcd + bias
    )

    grid_spec = pltpu.PrefetchScalarGridSpec(
        num_scalar_prefetch=0,
        grid=grid,
        in_specs=[
            pl.BlockSpec((D, f), lambda i: (0, 0)),          # wcd (VMEM resident)
            pl.BlockSpec(memory_space=pltpu.SMEM),           # bias scalar
            pl.BlockSpec((tile, D), lambda i: (i, 0)),       # h_pl tile (streamed)
            pl.BlockSpec((tile, D), lambda i: (i, 0)),       # h_mi tile (streamed)
        ],
        out_specs=pl.BlockSpec((2, f, tile), lambda i: (0, 0, i)),
    )

    out = pl.pallas_call(
        _disc_kernel,
        out_shape=jax.ShapeDtypeStruct((2, f, Nf), jnp.float32),
        grid_spec=grid_spec,
        compiler_params=pltpu.CompilerParams(
            dimension_semantics=("parallel",),   # row tiles independent -> 2 TCs on v7x
            vmem_limit_bytes=vmem_limit),
        cost_estimate=cost,
    )(wcd, b, hp, hm)

    # Un-fold: out[s] is (f, Nf); score of original row r*f + j lives at [j, r].
    sc_1 = out[0].T.reshape(N)
    sc_2 = out[1].T.reshape(N)
    # optional additive biases (matches the PyTorch optional-arg path)
    if s_bias1 is not None:
        sc_1 = sc_1 + s_bias1
    if s_bias2 is not None:
        sc_2 = sc_2 + s_bias2
    return jnp.concatenate([sc_1, sc_2])


def init_bilinear_params(key, n_h):
    """Deterministic xavier_uniform_ for nn.Bilinear(n_h, n_h, 1); bias = 0."""
    fan_in = n_h * n_h
    fan_out = 1 * n_h
    bound = math.sqrt(6.0 / (fan_in + fan_out))
    weight = jax.random.uniform(key, (1, n_h, n_h), jnp.float32, -bound, bound)
    bias = jnp.zeros((1,), jnp.float32)
    return weight, bias


def _reference(c, h_pl, h_mi, weight, bias):
    n_h = h_pl.shape[1]
    wc = weight.reshape(n_h, n_h).astype(jnp.float32) @ c.astype(jnp.float32)
    sc_1 = h_pl.astype(jnp.float32) @ wc + bias[0]
    sc_2 = h_mi.astype(jnp.float32) @ wc + bias[0]
    return jnp.concatenate([sc_1, sc_2])


if __name__ == "__main__":
    key = jax.random.PRNGKey(0)

    # Case 1: toy DGI config (n_h=32 -> lane-folding path; N=1000 exercises the
    # ragged last block, no padding).
    n_h, N = 32, 1000
    k_w, k_c, k_pl, k_mi, key = jax.random.split(key, 5)
    weight, bias = init_bilinear_params(k_w, n_h)
    c = jax.random.normal(k_c, (n_h,), jnp.float32)
    h_pl = jax.random.normal(k_pl, (N, n_h), jnp.float32)
    h_mi = jax.random.normal(k_mi, (N, n_h), jnp.float32)
    logits = discriminator_forward(c, h_pl, h_mi, weight, bias)
    jax.block_until_ready(logits)
    ref = _reference(c, h_pl, h_mi, weight, bias)
    assert logits.shape == (2 * N,)
    assert jnp.allclose(logits, ref, atol=1e-4, rtol=1e-4)

    # Case 2: n_h = 128 (no fold, full-lane rows), different ragged split.
    n_h2, N2 = 128, 300
    k_w, k_c, k_pl, k_mi, key = jax.random.split(key, 5)
    weight2, bias2 = init_bilinear_params(k_w, n_h2)
    c2 = jax.random.normal(k_c, (n_h2,), jnp.float32)
    h_pl2 = jax.random.normal(k_pl, (N2, n_h2), jnp.float32)
    h_mi2 = jax.random.normal(k_mi, (N2, n_h2), jnp.float32)
    logits2 = discriminator_forward(c2, h_pl2, h_mi2, weight2, bias2)
    jax.block_until_ready(logits2)
    ref2 = _reference(c2, h_pl2, h_mi2, weight2, bias2)
    assert logits2.shape == (2 * N2,)
    assert jnp.allclose(logits2, ref2, atol=1e-4, rtol=1e-4)

    print("KERNEL_OK")
</pallas_src>

<mosaic_0001>
module attributes {stable_mosaic.version = 11 : i64} {
  func.func @_disc_kernel(%arg0: i32, %arg1: memref<128x4xf32, #tpu.memory_space<vmem>>, %arg2: memref<1xf32, #tpu.memory_space<smem>>, %arg3: memref<128x128xf32, #tpu.memory_space<vmem>>, %arg4: memref<128x128xf32, #tpu.memory_space<vmem>>, %arg5: memref<2x4x128xf32, #tpu.memory_space<vmem>>) attributes {dimension_semantics = [#tpu.dimension_semantics<parallel>], iteration_bounds = array<i64: 2>, scalar_prefetch = 0 : i64, scratch_operands = 0 : i64, tpu.core_type = #tpu.core_type<tc>, window_params = [{pipeline_mode = #tpu.pipeline_mode<synchronous>, transform_indices = @transform_0, window_bounds = array<i64: 128, 4>}, {transform_indices = @transform_1, window_bounds = array<i64: 1>}, {transform_indices = @transform_2, window_bounds = array<i64: 128, 128>}, {transform_indices = @transform_3, window_bounds = array<i64: 128, 128>}, {transform_indices = @transform_4, window_bounds = array<i64: 2, 4, 128>}]} {
    %c0 = arith.constant 0 : index
    %c0_0 = arith.constant 0 : index
    %0 = vector.load %arg1[%c0, %c0_0] : memref<128x4xf32, #tpu.memory_space<vmem>>, vector<128x4xf32>
    %c0_1 = arith.constant 0 : index
    %1 = memref.load %arg2[%c0_1] : memref<1xf32, #tpu.memory_space<smem>>
    %c0_2 = arith.constant 0 : index
    %c0_3 = arith.constant 0 : index
    %2 = vector.load %arg3[%c0_2, %c0_3] : memref<128x128xf32, #tpu.memory_space<vmem>>, vector<128x128xf32>
    %cst = arith.constant dense<0.000000e+00> : vector<128x4xf32>
    %3 = tpu.matmul %2, %0, %cst {dimension_numbers = #tpu.dot_dimension_numbers<[1], [0], [0], [1], [0, 0, 1, 1], [], []>} : vector<128x128xf32>, vector<128x4xf32>, vector<128x4xf32> -> vector<128x4xf32>
    %4 = vector.broadcast %1 : f32 to vector<128x4xf32>
    %5 = arith.addf %3, %4 : vector<128x4xf32>
    %c0_4 = arith.constant 0 : index
    %c0_5 = arith.constant 0 : index
    %6 = vector.load %arg4[%c0_4, %c0_5] : memref<128x128xf32, #tpu.memory_space<vmem>>, vector<128x128xf32>
    %cst_6 = arith.constant dense<0.000000e+00> : vector<128x4xf32>
    %7 = tpu.matmul %6, %0, %cst_6 {dimension_numbers = #tpu.dot_dimension_numbers<[1], [0], [0], [1], [0, 0, 1, 1], [], []>} : vector<128x128xf32>, vector<128x4xf32>, vector<128x4xf32> -> vector<128x4xf32>
    %8 = vector.broadcast %1 : f32 to vector<128x4xf32>
    %9 = arith.addf %7, %8 : vector<128x4xf32>
    %10 = tpu.transpose %5, [1, 0] : vector<128x4xf32> -> vector<4x128xf32>
    %c0_7 = arith.constant 0 : index
    %c0_8 = arith.constant 0 : index
    %c0_9 = arith.constant 0 : index
    %11 = vector.load %arg5[%c0_7, %c0_8, %c0_9] : memref<2x4x128xf32, #tpu.memory_space<vmem>>, vector<1x4x128xf32>
    %12 = vector.shape_cast %11 : vector<1x4x128xf32> to vector<4x128xf32>
    %13 = vector.shape_cast %10 : vector<4x128xf32> to vector<1x4x128xf32>
    tpu.vector_store %arg5[%c0_7, %c0_8, %c0_9], %13 {strides = array<i32>} : memref<2x4x128xf32, #tpu.memory_space<vmem>>, vector<1x4x128xf32>,
    %14 = tpu.transpose %9, [1, 0] : vector<128x4xf32> -> vector<4x128xf32>
    %c1 = arith.constant 1 : index
    %c0_10 = arith.constant 0 : index
    %c0_11 = arith.constant 0 : index
    %15 = vector.load %arg5[%c1, %c0_10, %c0_11] : memref<2x4x128xf32, #tpu.memory_space<vmem>>, vector<1x4x128xf32>
    %16 = vector.shape_cast %15 : vector<1x4x128xf32> to vector<4x128xf32>
    %17 = vector.shape_cast %14 : vector<4x128xf32> to vector<1x4x128xf32>
    tpu.vector_store %arg5[%c1, %c0_10, %c0_11], %17 {strides = array<i32>} : memref<2x4x128xf32, #tpu.memory_space<vmem>>, vector<1x4x128xf32>,
    return
  }
  func.func @transform_0(%arg0: i32) -> (i32, i32) {
    %c0_i32 = arith.constant 0 : i32
    %c0_i32_0 = arith.constant 0 : i32
    %c0_i32_1 = arith.constant 0 : i32
    return %c0_i32, %c0_i32_0 : i32, i32
  }
  func.func @transform_1(%arg0: i32) -> i32 {
    %c0_i32 = arith.constant 0 : i32
    %c0_i32_0 = arith.constant 0 : i32
    return %c0_i32 : i32
  }
  func.func @transform_2(%arg0: i32) -> (i32, i32) {
    %c0_i32 = arith.constant 0 : i32
    %c0_i32_0 = arith.constant 0 : i32
    return %arg0, %c0_i32 : i32, i32
  }
  func.func @transform_3(%arg0: i32) -> (i32, i32) {
    %c0_i32 = arith.constant 0 : i32
    %c0_i32_0 = arith.constant 0 : i32
    return %arg0, %c0_i32 : i32, i32
  }
  func.func @transform_4(%arg0: i32) -> (i32, i32, i32) {
    %c0_i32 = arith.constant 0 : i32
    %c0_i32_0 = arith.constant 0 : i32
    %c0_i32_1 = arith.constant 0 : i32
    return %c0_i32, %c0_i32_0, %arg0 : i32, i32, i32
  }
}

</mosaic_0001>

<llo_original>
// kernel: tpu_custom_call.1
$region0: #{tpu_custom_call.1}
  #allocation0 [shape = 'u32[]', space=smem, size = 0x4, offset = 0x4, fixed_abs, tag = 'smem constant byte address 0x4 - core index']
  #allocation1 [shape = 'u32[144,128]{1,0:T(1,128)}', space=vmem, size = 0x12000, scoped, tag = 'internal scratch']
  #allocation2 [shape = 'f32[1]{0:T(128)S(6)}', space=smem, size = 0x200, scoped, tag = 'scoped memory for tpu_custom_call.1']
  %s0 = inlined_call_operand.vmem [shape: f32[128,4], index: 0, kind: input, shape index: {}]
  %s1 = inlined_call_operand.<no memory space> [shape: f32[1], index: 1, kind: input, shape index: {}]
  %s2 = inlined_call_operand.hbm [shape: f32[250,128], index: 2, kind: input, shape index: {}]
  %s3 = inlined_call_operand.hbm [shape: f32[250,128], index: 3, kind: input, shape index: {}]
  %s4 = inlined_call_operand.hbm [shape: f32[2,4,250], index: 4, kind: output, shape index: {}]
  %s5 = sld [smem:[#allocation0]]
  $region57: #{tpu_custom_call.1} parent=0
    _
  %s7 = ssub.s32 1, %s5
  %s8 = scalar_select 0, %s7, %s5
  %9 = sst [smem:[#allocation2]] %s1
  $region1: #{tpu_custom_call.1} parent=0
    #allocation3 [shape = 'u8[131072]{0}', space=vmem, size = 0x20000, scoped, tag = 'input window, operand 2']
    #allocation4 [shape = 's32[2]{0}', space=sflag, size = 0x8, scoped, tag = 'scoped memory for tpu_custom_call.1']
    #allocation5 [shape = 's32[2]{0}', space=sflag, size = 0x8, scoped, tag = 'scoped memory for tpu_custom_call.1']
    #allocation6 [shape = 'u8[131072]{0}', space=vmem, size = 0x20000, scoped, tag = 'input window, operand 3']
    #allocation7 [shape = 's32[2]{0}', space=sflag, size = 0x8, scoped, tag = 'scoped memory for tpu_custom_call.1']
    #allocation8 [shape = 'u8[8192]{0}', space=vmem, size = 0x2000, scoped, tag = 'output window, operand 0']
    %10 = vsyncpa [#allocation4], 0
    %s11 = scalar_lea.sflag [#allocation4], 1
    %12 = vsyncpa %s11, 0
    %13 = vsyncpa [#allocation7], 0
    %s14 = scalar_lea.sflag [#allocation7], 1
    %15 = vsyncpa %s14, 0
    %16 = vsyncpa [#allocation5], 0
    %s17 = scalar_lea.sflag [#allocation5], 1
    %18 = vsyncpa %s17, 0
    loop: start=0, step=1, limit=4
    $region2: #{tpu_custom_call.1} parent=1 // loop_pre_header
      _
    $region3: #{tpu_custom_call.1} parent=1 // loop_header
      %s20 = sphi 0, %s24
      %p21 = scmp.ge.s32.totalorder %s20, 4
      %s28 = sphi 0, %s28
      %s30 = sphi 0, %s28
      %s31 = sphi 0, %s30
      %s45 = sphi 0, %s31
      %s49 = sphi 0, %s49
      %s51 = sphi 0, %s49
      %s52 = sphi 0, %s51
      %s66 = sphi 0, %s52
      %s72 = sphi 0, %s74
      %s75 = sphi 0, %s72
      %s76 = sphi 0, %s75
      %s92 = sphi 0, %s76
      %s98 = sphi 0, %s100
      %s101 = sphi 0, %s98
      %s102 = sphi 0, %s101
      %s118 = sphi 0, %s102
      %s124 = sphi 0, %s126
      %s127 = sphi 0, %s124
      %s128 = sphi 0, %s127
      %s144 = sphi 0, %s128
    $region4: #{tpu_custom_call.1} parent=1 // loop_header_branch
      %23 = sbr.rel (%p21) target = $region8
    $region5: #{tpu_custom_call.1} parent=1 // loop_body
      %s25 = ssub.s32 %s20, 1
      %s26 = ssub.s32 %s20, 2
      %s27 = sadd.s32 %s20, 1
      %s29 = sadd.s32 %s28, 1
      %p32 = scmp.eq.s32.totalorder %s20, 1
      %p33 = scmp.ne.s32.totalorder %s28, %s30
      %p34 = scmp.eq.s32.totalorder %s20, 0
      %p35 = por %p33, %p34
      %p36 = scmp.ne.s32.totalorder %s28, %s30
      %p37 = scmp.eq.s32.totalorder %s25, 1
      %p38 = por %p36, %p37
      %p39 = scmp.ne.s32.totalorder %s30, %s31
      %p40 = scmp.eq.s32.totalorder %s25, 0
      %p41 = por %p39, %p40
      %p42 = scmp.ne.s32.totalorder %s30, %s31
      %p43 = scmp.eq.s32.totalorder %s26, 1
      %p44 = por %p42, %p43
      %p46 = scmp.ne.s32.totalorder %s31, %s45
      %p47 = scmp.eq.s32.totalorder %s26, 0
      %p48 = por %p46, %p47
      %s50 = sadd.s32 %s49, 1
      %p53 = scmp.eq.s32.totalorder %s20, 1
      %p54 = scmp.ne.s32.totalorder %s49, %s51
      %p55 = scmp.eq.s32.totalorder %s20, 0
      %p56 = por %p54, %p55
      %p57 = scmp.ne.s32.totalorder %s49, %s51
      %p58 = scmp.eq.s32.totalorder %s25, 1
      %p59 = por %p57, %p58
      %p60 = scmp.ne.s32.totalorder %s51, %s52
      %p61 = scmp.eq.s32.totalorder %s25, 0
      %p62 = por %p60, %p61
      %p63 = scmp.ne.s32.totalorder %s51, %s52
      %p64 = scmp.eq.s32.totalorder %s26, 1
      %p65 = por %p63, %p64
      %p67 = scmp.ne.s32.totalorder %s52, %s66
      %p68 = scmp.eq.s32.totalorder %s26, 0
      %p69 = por %p67, %p68
      %s70 = ssub.s32 %s20, %s27
      %p71 = scmp.eq.s32.totalorder %s70, 0
      %s73 = sadd.s32 %s72, 1
      %s74 = scalar_select %p71, %s72, %s73
      %p77 = pneg %p71
      %p78 = scmp.eq.s32.totalorder %s20, 1
      %p79 = por %p77, %p78
      %p80 = scmp.ne.s32.totalorder %s72, %s75
      %p81 = scmp.eq.s32.totalorder %s20, 0
      %p82 = por %p80, %p81
      %p83 = scmp.ne.s32.totalorder %s72, %s75
      %p84 = scmp.eq.s32.totalorder %s25, 1
      %p85 = por %p83, %p84
      %p86 = scmp.ne.s32.totalorder %s75, %s76
      %p87 = scmp.eq.s32.totalorder %s25, 0
      %p88 = por %p86, %p87
      %p89 = scmp.ne.s32.totalorder %s75, %s76
      %p90 = scmp.eq.s32.totalorder %s26, 1
      %p91 = por %p89, %p90
      %p93 = scmp.ne.s32.totalorder %s76, %s92
      %p94 = scmp.eq.s32.totalorder %s26, 0
      %p95 = por %p93, %p94
      %s96 = ssub.s32 %s20, %s27
      %p97 = scmp.eq.s32.totalorder %s96, 0
      %s99 = sadd.s32 %s98, 1
      %s100 = scalar_select %p97, %s98, %s99
      %p103 = pneg %p97
      %p104 = scmp.eq.s32.totalorder %s20, 1
      %p105 = por %p103, %p104
      %p106 = scmp.ne.s32.totalorder %s98, %s101
      %p107 = scmp.eq.s32.totalorder %s20, 0
      %p108 = por %p106, %p107
      %p109 = scmp.ne.s32.totalorder %s98, %s101
      %p110 = scmp.eq.s32.totalorder %s25, 1
      %p111 = por %p109, %p110
      %p112 = scmp.ne.s32.totalorder %s101, %s102
      %p113 = scmp.eq.s32.totalorder %s25, 0
      %p114 = por %p112, %p113
      %p115 = scmp.ne.s32.totalorder %s101, %s102
      %p116 = scmp.eq.s32.totalorder %s26, 1
      %p117 = por %p115, %p116
      %p119 = scmp.ne.s32.totalorder %s102, %s118
      %p120 = scmp.eq.s32.totalorder %s26, 0
      %p121 = por %p119, %p120
      %s122 = ssub.s32 %s20, %s27
      %p123 = scmp.eq.s32.totalorder %s122, 0
      %s125 = sadd.s32 %s124, 1
      %s126 = scalar_select %p123, %s124, %s125
      %p129 = pneg %p123
      %p130 = scmp.eq.s32.totalorder %s20, 1
      %p131 = por %p129, %p130
      %p132 = scmp.ne.s32.totalorder %s124, %s127
      %p133 = scmp.eq.s32.totalorder %s20, 0
      %p134 = por %p132, %p133
      %p135 = scmp.ne.s32.totalorder %s124, %s127
      %p136 = scmp.eq.s32.totalorder %s25, 1
      %p137 = por %p135, %p136
      %p138 = scmp.ne.s32.totalorder %s127, %s128
      %p139 = scmp.eq.s32.totalorder %s25, 0
      %p140 = por %p138, %p139
      %p141 = scmp.ne.s32.totalorder %s127, %s128
      %p142 = scmp.eq.s32.totalorder %s26, 1
      %p143 = por %p141, %p142
      %p145 = scmp.ne.s32.totalorder %s128, %s144
      %p146 = scmp.eq.s32.totalorder %s26, 0
      %p147 = por %p145, %p146
      %p148 = scmp.le.s32.totalorder 1, %s20
      %p149 = scmp.lt.s32.totalorder %s20, 3
      %p150 = pnand %p148, %p149
      %p151 = pneg %p150
      // Predicated region
      $region9: #{tpu_custom_call.1} parent=5 // pred_check
        _
      $region10: #{tpu_custom_call.1} parent=5 // pred_check_branch
        %153 = sbr.rel (%p150) target = $region12
      $region11: #{tpu_custom_call.1} parent=5 // pred_region
        %s154 = ssub.s32 %s20, 1
        // Predicated region
        $region13: #{tpu_custom_call.1} parent=11 // pred_check
          %p155 = pneg %p41
        $region14: #{tpu_custom_call.1} parent=11 // pred_check_branch
          %157 = sbr.rel (%p155) target = $region16
        $region15: #{tpu_custom_call.1} parent=11 // pred_region
          _
        $region16: #{tpu_custom_call.1} parent=11 // pred_fallthru
          _
        // Predicated region
        $region17: #{tpu_custom_call.1} parent=11 // pred_check
          %p158 = pneg %p62
        $region18: #{tpu_custom_call.1} parent=11 // pred_check_branch
          %160 = sbr.rel (%p158) target = $region20
        $region19: #{tpu_custom_call.1} parent=11 // pred_region
          _
        $region20: #{tpu_custom_call.1} parent=11 // pred_fallthru
          _
      $region12: #{tpu_custom_call.1} parent=5 // pred_fallthru
        _
      %p161 = scmp.lt.s32.totalorder %s20, 2
      // Predicated region
      $region21: #{tpu_custom_call.1} parent=5 // pred_check
        %p162 = pneg %p161
      $region22: #{tpu_custom_call.1} parent=5 // pred_check_branch
        %164 = sbr.rel (%p162) target = $region24
      $region23: #{tpu_custom_call.1} parent=5 // pred_region
        // Predicated region
        $region25: #{tpu_custom_call.1} parent=23 // pred_check
          %p165 = pneg %p82
        $region26: #{tpu_custom_call.1} parent=23 // pred_check_branch
          %167 = sbr.rel (%p165) target = $region28
        $region27: #{tpu_custom_call.1} parent=23 // pred_region
          %s168 = sand.u32 %s72, 1
          %s169 = scalar_lea.sflag [#allocation4], %s168
          %s170 = sand.u32 %s72, 1
          %s171 = smul.addr %s170, 128
          %s172 = scalar_lea.vmem [#allocation3], %s171
          %s173 = smul.u32 16, %s20
          %s175 = ssub.s32 2048, 2048
          %176 = vsyncadd %s169, %s175
          %s177 = smul.addr %s173, 128
          %s178 = scalar_lea.hbm %s2, %s177
          %s179 = sshll.u32 %s172, 4
          %s180 = int_to_ptr.vmem [resolvable:$true] %s179
          %185 = dma.hbm_to_vmem [thread:$0]  %s178, 2048, %s180, %s169, 128, 128, 8
        $region28: #{tpu_custom_call.1} parent=23 // pred_fallthru
          _
        // Predicated region
        $region29: #{tpu_custom_call.1} parent=23 // pred_check
          %p186 = pneg %p108
        $region30: #{tpu_custom_call.1} parent=23 // pred_check_branch
          %188 = sbr.rel (%p186) target = $region32
        $region31: #{tpu_custom_call.1} parent=23 // pred_region
          %s189 = sand.u32 %s98, 1
          %s190 = scalar_lea.sflag [#allocation7], %s189
          %s191 = sand.u32 %s98, 1
          %s192 = smul.addr %s191, 128
          %s193 = scalar_lea.vmem [#allocation6], %s192
          %s194 = smul.u32 16, %s20
          %s196 = ssub.s32 2048, 2048
          %197 = vsyncadd %s190, %s196
          %s198 = smul.addr %s194, 128
          %s199 = scalar_lea.hbm %s3, %s198
          %s200 = sshll.u32 %s193, 4
          %s201 = int_to_ptr.vmem [resolvable:$true] %s200
          %206 = dma.hbm_to_vmem [thread:$0]  %s199, 2048, %s201, %s190, 128, 128, 8
        $region32: #{tpu_custom_call.1} parent=23 // pred_fallthru
          _
      $region24: #{tpu_custom_call.1} parent=5 // pred_fallthru
        _
      %p207 = scmp.le.s32.totalorder 1, %s20
      %p208 = scmp.lt.s32.totalorder %s20, 3
      %p209 = pnand %p207, %p208
      %p210 = pneg %p209
      // Predicated region
      $region33: #{tpu_custom_call.1} parent=5 // pred_check
        _
      $region34: #{tpu_custom_call.1} parent=5 // pred_check_branch
        %212 = sbr.rel (%p209) target = $region36
      $region35: #{tpu_custom_call.1} parent=5 // pred_region
        %s213 = ssub.s32 %s20, 1
        %s214 = sand.u32 %s75, 1
        %s215 = scalar_lea.sflag [#allocation4], %s214
        %s216 = sand.u32 %s75, 1
        %s217 = smul.addr %s216, 128
        %s218 = scalar_lea.vmem [#allocation3], %s217
        // Predicated region
        $region37: #{tpu_custom_call.1} parent=35 // pred_check
          %p219 = pneg %p88
        $region38: #{tpu_custom_call.1} parent=35 // pred_check_branch
          %221 = sbr.rel (%p219) target = $region40
        $region39: #{tpu_custom_call.1} parent=35 // pred_region
          %222 = dma.done %s215, 2048
        $region40: #{tpu_custom_call.1} parent=35 // pred_fallthru
          _
        %s223 = sand.u32 %s101, 1
        %s224 = scalar_lea.sflag [#allocation7], %s223
        %s225 = sand.u32 %s101, 1
        %s226 = smul.addr %s225, 128
        %s227 = scalar_lea.vmem [#allocation6], %s226
        // Predicated region
        $region41: #{tpu_custom_call.1} parent=35 // pred_check
          %p228 = pneg %p114
        $region42: #{tpu_custom_call.1} parent=35 // pred_check_branch
          %230 = sbr.rel (%p228) target = $region44
        $region43: #{tpu_custom_call.1} parent=35 // pred_region
          %231 = dma.done %s224, 2048
        $region44: #{tpu_custom_call.1} parent=35 // pred_fallthru
          _
        %p232 = pneg %p41
        %p233 = pneg %p38
        %p234 = pneg %p62
        %p235 = pneg %p59
        %s236 = sand.u32 %s75, 1
        %s237 = scalar_lea.sflag [#allocation4], %s236
        %s238 = sand.u32 %s75, 1
        %s239 = smul.addr %s238, 128
        %s240 = scalar_lea.vmem [#allocation3], %s239
        %p241 = pneg %p88
        %p242 = pneg %p85
        %s243 = sand.u32 %s101, 1
        %s244 = scalar_lea.sflag [#allocation7], %s243
        %s245 = sand.u32 %s101, 1
        %s246 = smul.addr %s245, 128
        %s247 = scalar_lea.vmem [#allocation6], %s246
        %p248 = pneg %p114
        %p249 = pneg %p111
        %p250 = pneg %p140
        %p251 = pneg %p137
        %s252 = sand.u32 %s127, 1
        %s253 = scalar_lea.sflag [#allocation5], %s252
        %s254 = sand.u32 %s127, 1
        %s255 = smul.addr %s254, 8
        %s256 = scalar_lea.vmem [#allocation8], %s255
        %s257 = smul.u32 16, %s25
        %s258 = smul.u32 16, %s25
        %v259 = vld [vmem:[%s0] sm:$0xff]
        %v260 = vld [vmem:[%s0 + $0x8] sm:$0xff]
        %v261 = vld [vmem:[%s0 + $0x10] sm:$0xff]
        %v262 = vld [vmem:[%s0 + $0x18] sm:$0xff]
        %v263 = vld [vmem:[%s0 + $0x20] sm:$0xff]
        %v264 = vld [vmem:[%s0 + $0x28] sm:$0xff]
        %v265 = vld [vmem:[%s0 + $0x30] sm:$0xff]
        %v266 = vld [vmem:[%s0 + $0x38] sm:$0xff]
        %v267 = vld [vmem:[%s0 + $0x40] sm:$0xff]
        %v268 = vld [vmem:[%s0 + $0x48] sm:$0xff]
        %v269 = vld [vmem:[%s0 + $0x50] sm:$0xff]
        %v270 = vld [vmem:[%s0 + $0x58] sm:$0xff]
        %v271 = vld [vmem:[%s0 + $0x60] sm:$0xff]
        %v272 = vld [vmem:[%s0 + $0x68] sm:$0xff]
        %v273 = vld [vmem:[%s0 + $0x70] sm:$0xff]
        %v274 = vld [vmem:[%s0 + $0x78] sm:$0xff]
        %s275 = sld [smem:[#allocation2]]
        %v276 = vld [vmem:[%s218] sm:$0xff]
        %v277 = vld [vmem:[%s218 + $0x8] sm:$0xff]
        %v278 = vld [vmem:[%s218 + $0x10] sm:$0xff]
        %v279 = vld [vmem:[%s218 + $0x18] sm:$0xff]
        %v280 = vld [vmem:[%s218 + $0x20] sm:$0xff]
        %v281 = vld [vmem:[%s218 + $0x28] sm:$0xff]
        %v282 = vld [vmem:[%s218 + $0x30] sm:$0xff]
        %v283 = vld [vmem:[%s218 + $0x38] sm:$0xff]
        %v284 = vld [vmem:[%s218 + $0x40] sm:$0xff]
        %v285 = vld [vmem:[%s218 + $0x48] sm:$0xff]
        %v286 = vld [vmem:[%s218 + $0x50] sm:$0xff]
        %v287 = vld [vmem:[%s218 + $0x58] sm:$0xff]
        %v288 = vld [vmem:[%s218 + $0x60] sm:$0xff]
        %v289 = vld [vmem:[%s218 + $0x68] sm:$0xff]
        %v290 = vld [vmem:[%s218 + $0x70] sm:$0xff]
        %v291 = vld [vmem:[%s218 + $0x78] sm:$0xff]
        %v292 = vstv %s275
        %293 = vmatprep.subr.mxu0 0.0
        %294 = vmatpush1.msra.mxu0 %v259
        %295 = vmatprep.subr.mxu0 0.0
        %296 = vmatpush1.msra.mxu0 %v260
        %297 = vmatprep.subr.mxu0 0.0
        %298 = vmatpush1.msra.mxu0 %v261
        %299 = vmatprep.subr.mxu0 0.0
        %300 = vmatpush1.msra.mxu0 %v262
        %301 = vmatprep.subr.mxu0 0.0
        %302 = vmatpush1.msra.mxu0 %v263
        %303 = vmatprep.subr.mxu0 0.0
        %304 = vmatpush1.msra.mxu0 %v264
        %305 = vmatprep.subr.mxu0 0.0
        %306 = vmatpush1.msra.mxu0 %v265
        %307 = vmatprep.subr.mxu0 0.0
        %308 = vmatpush1.msra.mxu0 %v266
        %309 = vmatprep.subr.mxu0 0.0
        %310 = vmatpush1.msra.mxu0 %v267
        %311 = vmatprep.subr.mxu0 0.0
        %312 = vmatpush1.msra.mxu0 %v268
        %313 = vmatprep.subr.mxu0 0.0
        %314 = vmatpush1.msra.mxu0 %v269
        %315 = vmatprep.subr.mxu0 0.0
        %316 = vmatpush1.msra.mxu0 %v270
        %317 = vmatprep.subr.mxu0 0.0
        %318 = vmatpush1.msra.mxu0 %v271
        %319 = vmatprep.subr.mxu0 0.0
        %320 = vmatpush1.msra.mxu0 %v272
        %321 = vmatprep.subr.mxu0 0.0
        %322 = vmatpush1.msra.mxu0 %v273
        %323 = vmatprep.subr.mxu0 0.0
        %324 = vmatpush1.msra.mxu0 %v274
        %325 = vmatprep.subr.mxu0 0.0
        %326 = vmatpush1.msra.mxu0 0.0
        %327 = vmatprep.subr.mxu0 0.0
        %328 = vmatpush1.msra.mxu0 0.0
        %329 = vmatprep.subr.mxu0 0.0
        %330 = vmatpush1.msra.mxu0 0.0
        %331 = vmatprep.subr.mxu0 0.0
        %332 = vmatpush1.msra.mxu0 0.0
        %333 = vmatprep.subr.mxu0 0.0
        %334 = vmatpush1.msra.mxu0 0.0
        %335 = vmatprep.subr.mxu0 0.0
        %336 = vmatpush1.msra.mxu0 0.0
        %337 = vmatprep.subr.mxu0 0.0
        %338 = vmatpush1.msra.mxu0 0.0
        %339 = vmatprep.subr.mxu0 0.0
        %340 = vmatpush1.msra.mxu0 0.0
        %341 = vmatprep.subr.mxu0 0.0
        %342 = vmatpush1.msra.mxu0 0.0
        %343 = vmatprep.subr.mxu0 0.0
        %344 = vmatpush1.msra.mxu0 0.0
        %345 = vmatprep.subr.mxu0 0.0
        %346 = vmatpush1.msra.mxu0 0.0
        %347 = vmatprep.subr.mxu0 0.0
        %348 = vmatpush1.msra.mxu0 0.0
        %349 = vmatprep.subr.mxu0 0.0
        %350 = vmatpush1.msra.mxu0 0.0
        %351 = vmatprep.subr.mxu0 0.0
        %352 = vmatpush1.msra.mxu0 0.0
        %353 = vmatprep.subr.mxu0 0.0
        %354 = vmatpush1.msra.mxu0 0.0
        %355 = vmatprep.subr.mxu0 0.0
        %356 = vmatpush1.msra.mxu0 0.0
        %357 = vmatprep.mubr.f32.mxu0 0.0
        %358 = vmatmul.mubr.f32.gmra.mrb[0].mxu0 %v276
        %v359 = vpop.f32.mrb[0].mxu0
        %v360 = vadd.f32 %v292, %v359
        %v361 = vpop.f32.mrb[0].mxu0
        %362 = vmatprep.mubr.f32.mxu0 0.0
        %363 = vmatmul.mubr.f32.gmra.mrb[0].mxu0 %v277
        %v364 = vpop.f32.mrb[0].mxu0
        %v365 = vadd.f32 %v292, %v364
        %v366 = vpop.f32.mrb[0].mxu0
        %367 = vmatprep.mubr.f32.mxu0 0.0
        %368 = vmatmul.mubr.f32.gmra.mrb[0].mxu0 %v278
        %v369 = vpop.f32.mrb[0].mxu0
        %v370 = vadd.f32 %v292, %v369
        %v371 = vpop.f32.mrb[0].mxu0
        %372 = vmatprep.mubr.f32.mxu0 0.0
        %373 = vmatmul.mubr.f32.gmra.mrb[0].mxu0 %v279
        %v374 = vpop.f32.mrb[0].mxu0
        %v375 = vadd.f32 %v292, %v374
        %v376 = vpop.f32.mrb[0].mxu0
        %377 = vmatprep.mubr.f32.mxu0 0.0
        %378 = vmatmul.mubr.f32.gmra.mrb[0].mxu0 %v280
        %v379 = vpop.f32.mrb[0].mxu0
        %v380 = vadd.f32 %v292, %v379
        %v381 = vpop.f32.mrb[0].mxu0
        %382 = vmatprep.mubr.f32.mxu0 0.0
        %383 = vmatmul.mubr.f32.gmra.mrb[0].mxu0 %v281
        %v384 = vpop.f32.mrb[0].mxu0
        %v385 = vadd.f32 %v292, %v384
        %v386 = vpop.f32.mrb[0].mxu0
        %387 = vmatprep.mubr.f32.mxu0 0.0
        %388 = vmatmul.mubr.f32.gmra.mrb[0].mxu0 %v282
        %v389 = vpop.f32.mrb[0].mxu0
        %v390 = vadd.f32 %v292, %v389
        %v391 = vpop.f32.mrb[0].mxu0
        %392 = vmatprep.mubr.f32.mxu0 0.0
        %393 = vmatmul.mubr.f32.gmra.mrb[0].mxu0 %v283
        %v394 = vpop.f32.mrb[0].mxu0
        %v395 = vadd.f32 %v292, %v394
        %v396 = vpop.f32.mrb[0].mxu0
        %397 = vmatprep.mubr.f32.mxu0 0.0
        %398 = vmatmul.mubr.f32.gmra.mrb[0].mxu0 %v284
        %v399 = vpop.f32.mrb[0].mxu0
        %v400 = vadd.f32 %v292, %v399
        %v401 = vpop.f32.mrb[0].mxu0
        %402 = vmatprep.mubr.f32.mxu0 0.0
        %403 = vmatmul.mubr.f32.gmra.mrb[0].mxu0 %v285
        %v404 = vpop.f32.mrb[0].mxu0
        %v405 = vadd.f32 %v292, %v404
        %v406 = vpop.f32.mrb[0].mxu0
        %407 = vmatprep.mubr.f32.mxu0 0.0
        %408 = vmatmul.mubr.f32.gmra.mrb[0].mxu0 %v286
        %v409 = vpop.f32.mrb[0].mxu0
        %v410 = vadd.f32 %v292, %v409
        %v411 = vpop.f32.mrb[0].mxu0
        %412 = vmatprep.mubr.f32.mxu0 0.0
        %413 = vmatmul.mubr.f32.gmra.mrb[0].mxu0 %v287
        %v414 = vpop.f32.mrb[0].mxu0
        %v415 = vadd.f32 %v292, %v414
        %v416 = vpop.f32.mrb[0].mxu0
        %417 = vmatprep.mubr.f32.mxu0 0.0
        %418 = vmatmul.mubr.f32.gmra.mrb[0].mxu0 %v288
        %v419 = vpop.f32.mrb[0].mxu0
        %v420 = vadd.f32 %v292, %v419
        %v421 = vpop.f32.mrb[0].mxu0
        %422 = vmatprep.mubr.f32.mxu0 0.0
        %423 = vmatmul.mubr.f32.gmra.mrb[0].mxu0 %v289
        %v424 = vpop.f32.mrb[0].mxu0
        %v425 = vadd.f32 %v292, %v424
        %v426 = vpop.f32.mrb[0].mxu0
        %427 = vmatprep.mubr.f32.mxu0 0.0
        %428 = vmatmul.mubr.f32.gmra.mrb[0].mxu0 %v290
        %v429 = vpop.f32.mrb[0].mxu0
        %v430 = vadd.f32 %v292, %v429
        %v431 = vpop.f32.mrb[0].mxu0
        %432 = vmatprep.mubr.f32.mxu0 0.0
        %433 = vmatmul.mubr.f32.gmra.mrb[0].mxu0 %v291
        %v434 = vpop.f32.mrb[0].mxu0
        %v435 = vadd.f32 %v292, %v434
        %v436 = vpop.f32.mrb[0].mxu0
        %437 = vdwg.mxu0
        %v438 = vld [vmem:[%s227] sm:$0xff]
        %v439 = vld [vmem:[%s227 + $0x8] sm:$0xff]
        %v440 = vld [vmem:[%s227 + $0x10] sm:$0xff]
        %v441 = vld [vmem:[%s227 + $0x18] sm:$0xff]
        %v442 = vld [vmem:[%s227 + $0x20] sm:$0xff]
        %v443 = vld [vmem:[%s227 + $0x28] sm:$0xff]
        %v444 = vld [vmem:[%s227 + $0x30] sm:$0xff]
        %v445 = vld [vmem:[%s227 + $0x38] sm:$0xff]
        %v446 = vld [vmem:[%s227 + $0x40] sm:$0xff]
        %v447 = vld [vmem:[%s227 + $0x48] sm:$0xff]
        %v448 = vld [vmem:[%s227 + $0x50] sm:$0xff]
        %v449 = vld [vmem:[%s227 + $0x58] sm:$0xff]
        %v450 = vld [vmem:[%s227 + $0x60] sm:$0xff]
        %v451 = vld [vmem:[%s227 + $0x68] sm:$0xff]
        %v452 = vld [vmem:[%s227 + $0x70] sm:$0xff]
        %v453 = vld [vmem:[%s227 + $0x78] sm:$0xff]
        %454 = vmatprep.subr.mxu0 0.0
        %455 = vmatpush1.msra.mxu0 %v259
        %456 = vmatprep.subr.mxu0 0.0
        %457 = vmatpush1.msra.mxu0 %v260
        %458 = vmatprep.subr.mxu0 0.0
        %459 = vmatpush1.msra.mxu0 %v261
        %460 = vmatprep.subr.mxu0 0.0
        %461 = vmatpush1.msra.mxu0 %v262
        %462 = vmatprep.subr.mxu0 0.0
        %463 = vmatpush1.msra.mxu0 %v263
        %464 = vmatprep.subr.mxu0 0.0
        %465 = vmatpush1.msra.mxu0 %v264
        %466 = vmatprep.subr.mxu0 0.0
        %467 = vmatpush1.msra.mxu0 %v265
        %468 = vmatprep.subr.mxu0 0.0
        %469 = vmatpush1.msra.mxu0 %v266
        %470 = vmatprep.subr.mxu0 0.0
        %471 = vmatpush1.msra.mxu0 %v267
        %472 = vmatprep.subr.mxu0 0.0
        %473 = vmatpush1.msra.mxu0 %v268
        %474 = vmatprep.subr.mxu0 0.0
        %475 = vmatpush1.msra.mxu0 %v269
        %476 = vmatprep.subr.mxu0 0.0
        %477 = vmatpush1.msra.mxu0 %v270
        %478 = vmatprep.subr.mxu0 0.0
        %479 = vmatpush1.msra.mxu0 %v271
        %480 = vmatprep.subr.mxu0 0.0
        %481 = vmatpush1.msra.mxu0 %v272
        %482 = vmatprep.subr.mxu0 0.0
        %483 = vmatpush1.msra.mxu0 %v273
        %484 = vmatprep.subr.mxu0 0.0
        %485 = vmatpush1.msra.mxu0 %v274
        %486 = vmatprep.subr.mxu0 0.0
        %487 = vmatpush1.msra.mxu0 0.0
        %488 = vmatprep.subr.mxu0 0.0
        %489 = vmatpush1.msra.mxu0 0.0
        %490 = vmatprep.subr.mxu0 0.0
        %491 = vmatpush1.msra.mxu0 0.0
        %492 = vmatprep.subr.mxu0 0.0
        %493 = vmatpush1.msra.mxu0 0.0
        %494 = vmatprep.subr.mxu0 0.0
        %495 = vmatpush1.msra.mxu0 0.0
        %496 = vmatprep.subr.mxu0 0.0
        %497 = vmatpush1.msra.mxu0 0.0
        %498 = vmatprep.subr.mxu0 0.0
        %499 = vmatpush1.msra.mxu0 0.0
        %500 = vmatprep.subr.mxu0 0.0
        %501 = vmatpush1.msra.mxu0 0.0
        %502 = vmatprep.subr.mxu0 0.0
        %503 = vmatpush1.msra.mxu0 0.0
        %504 = vmatprep.subr.mxu0 0.0
        %505 = vmatpush1.msra.mxu0 0.0
        %506 = vmatprep.subr.mxu0 0.0
        %507 = vmatpush1.msra.mxu0 0.0
        %508 = vmatprep.subr.mxu0 0.0
        %509 = vmatpush1.msra.mxu0 0.0
        %510 = vmatprep.subr.mxu0 0.0
        %511 = vmatpush1.msra.mxu0 0.0
        %512 = vmatprep.subr.mxu0 0.0
        %513 = vmatpush1.msra.mxu0 0.0
        %514 = vmatprep.subr.mxu0 0.0
        %515 = vmatpush1.msra.mxu0 0.0
        %516 = vmatprep.subr.mxu0 0.0
        %517 = vmatpush1.msra.mxu0 0.0
        %518 = vmatprep.mubr.f32.mxu0 0.0
        %519 = vmatmul.mubr.f32.gmra.mrb[0].mxu0 %v438
        %v520 = vpop.f32.mrb[0].mxu0
        %v521 = vadd.f32 %v292, %v520
        %v522 = vpop.f32.mrb[0].mxu0
        %523 = vmatprep.mubr.f32.mxu0 0.0
        %524 = vmatmul.mubr.f32.gmra.mrb[0].mxu0 %v439
        %v525 = vpop.f32.mrb[0].mxu0
        %v526 = vadd.f32 %v292, %v525
        %v527 = vpop.f32.mrb[0].mxu0
        %528 = vmatprep.mubr.f32.mxu0 0.0
        %529 = vmatmul.mubr.f32.gmra.mrb[0].mxu0 %v440
        %v530 = vpop.f32.mrb[0].mxu0
        %v531 = vadd.f32 %v292, %v530
        %v532 = vpop.f32.mrb[0].mxu0
        %533 = vmatprep.mubr.f32.mxu0 0.0
        %534 = vmatmul.mubr.f32.gmra.mrb[0].mxu0 %v441
        %v535 = vpop.f32.mrb[0].mxu0
        %v536 = vadd.f32 %v292, %v535
        %v537 = vpop.f32.mrb[0].mxu0
        %538 = vmatprep.mubr.f32.mxu0 0.0
        %539 = vmatmul.mubr.f32.gmra.mrb[0].mxu0 %v442
        %v540 = vpop.f32.mrb[0].mxu0
        %v541 = vadd.f32 %v292, %v540
        %v542 = vpop.f32.mrb[0].mxu0
        %543 = vmatprep.mubr.f32.mxu0 0.0
        %544 = vmatmul.mubr.f32.gmra.mrb[0].mxu0 %v443
        %v545 = vpop.f32.mrb[0].mxu0
        %v546 = vadd.f32 %v292, %v545
        %v547 = vpop.f32.mrb[0].mxu0
        %548 = vmatprep.mubr.f32.mxu0 0.0
        %549 = vmatmul.mubr.f32.gmra.mrb[0].mxu0 %v444
        %v550 = vpop.f32.mrb[0].mxu0
        %v551 = vadd.f32 %v292, %v550
        %v552 = vpop.f32.mrb[0].mxu0
        %553 = vmatprep.mubr.f32.mxu0 0.0
        %554 = vmatmul.mubr.f32.gmra.mrb[0].mxu0 %v445
        %v555 = vpop.f32.mrb[0].mxu0
        %v556 = vadd.f32 %v292, %v555
        %v557 = vpop.f32.mrb[0].mxu0
        %558 = vmatprep.mubr.f32.mxu0 0.0
        %559 = vmatmul.mubr.f32.gmra.mrb[0].mxu0 %v446
        %v560 = vpop.f32.mrb[0].mxu0
        %v561 = vadd.f32 %v292, %v560
        %v562 = vpop.f32.mrb[0].mxu0
        %563 = vmatprep.mubr.f32.mxu0 0.0
        %564 = vmatmul.mubr.f32.gmra.mrb[0].mxu0 %v447
        %v565 = vpop.f32.mrb[0].mxu0
        %v566 = vadd.f32 %v292, %v565
        %v567 = vpop.f32.mrb[0].mxu0
        %568 = vmatprep.mubr.f32.mxu0 0.0
        %569 = vmatmul.mubr.f32.gmra.mrb[0].mxu0 %v448
        %v570 = vpop.f32.mrb[0].mxu0
        %v571 = vadd.f32 %v292, %v570
        %v572 = vpop.f32.mrb[0].mxu0
        %573 = vmatprep.mubr.f32.mxu0 0.0
        %574 = vmatmul.mubr.f32.gmra.mrb[0].mxu0 %v449
        %v575 = vpop.f32.mrb[0].mxu0
        %v576 = vadd.f32 %v292, %v575
        %v577 = vpop.f32.mrb[0].mxu0
        %578 = vmatprep.mubr.f32.mxu0 0.0
        %579 = vmatmul.mubr.f32.gmra.mrb[0].mxu0 %v450
        %v580 = vpop.f32.mrb[0].mxu0
        %v581 = vadd.f32 %v292, %v580
        %v582 = vpop.f32.mrb[0].mxu0
        %583 = vmatprep.mubr.f32.mxu0 0.0
        %584 = vmatmul.mubr.f32.gmra.mrb[0].mxu0 %v451
        %v585 = vpop.f32.mrb[0].mxu0
        %v586 = vadd.f32 %v292, %v585
        %v587 = vpop.f32.mrb[0].mxu0
        %588 = vmatprep.mubr.f32.mxu0 0.0
        %589 = vmatmul.mubr.f32.gmra.mrb[0].mxu0 %v452
        %v590 = vpop.f32.mrb[0].mxu0
        %v591 = vadd.f32 %v292, %v590
        %v592 = vpop.f32.mrb[0].mxu0
        %593 = vmatprep.mubr.f32.mxu0 0.0
        %594 = vmatmul.mubr.f32.gmra.mrb[0].mxu0 %v453
        %v595 = vpop.f32.mrb[0].mxu0
        %v596 = vadd.f32 %v292, %v595
        %v597 = vpop.f32.mrb[0].mxu0
        %598 = vdwg.mxu0
        %599 = vxpose.xlu0.b32.start [1/16] %v360, 128
        %600 = vxpose.xlu0.b32.cont [2/16] %v365, 128
        %601 = vxpose.xlu0.b32.cont [3/16] %v370, 128
        %602 = vxpose.xlu0.b32.cont [4/16] %v375, 128
        %603 = vxpose.xlu0.b32.cont [5/16] %v380, 128
        %604 = vxpose.xlu0.b32.cont [6/16] %v385, 128
        %605 = vxpose.xlu0.b32.cont [7/16] %v390, 128
        %606 = vxpose.xlu0.b32.cont [8/16] %v395, 128
        %607 = vxpose.xlu0.b32.cont [9/16] %v400, 128
        %608 = vxpose.xlu0.b32.cont [10/16] %v405, 128
        %609 = vxpose.xlu0.b32.cont [11/16] %v410, 128
        %610 = vxpose.xlu0.b32.cont [12/16] %v415, 128
        %611 = vxpose.xlu0.b32.cont [13/16] %v420, 128
        %612 = vxpose.xlu0.b32.cont [14/16] %v425, 128
        %613 = vxpose.xlu0.b32.cont [15/16] %v430, 128
        %614 = vxpose.xlu0.b32.end [16/16] %v435, 128
        %v615 = vpop.trf.xlu0
        %v616 = vpop.trf.xlu0
        %v617 = vpop.trf.xlu0
        %v618 = vpop.trf.xlu0
        %v619 = vpop.trf.xlu0
        %v620 = vpop.trf.xlu0
        %v621 = vpop.trf.xlu0
        %v622 = vpop.trf.xlu0
        %v623 = vpop.trf.xlu0
        %v624 = vpop.trf.xlu0
        %v625 = vpop.trf.xlu0
        %v626 = vpop.trf.xlu0
        %v627 = vpop.trf.xlu0
        %v628 = vpop.trf.xlu0
        %v629 = vpop.trf.xlu0
        %v630 = vpop.trf.xlu0
        %631 = vst [vmem:[%s256] sm:$0xf] %v615
        %632 = vxpose.xlu0.b32.start [1/16] %v521, 128
        %633 = vxpose.xlu0.b32.cont [2/16] %v526, 128
        %634 = vxpose.xlu0.b32.cont [3/16] %v531, 128
        %635 = vxpose.xlu0.b32.cont [4/16] %v536, 128
        %636 = vxpose.xlu0.b32.cont [5/16] %v541, 128
        %637 = vxpose.xlu0.b32.cont [6/16] %v546, 128
        %638 = vxpose.xlu0.b32.cont [7/16] %v551, 128
        %639 = vxpose.xlu0.b32.cont [8/16] %v556, 128
        %640 = vxpose.xlu0.b32.cont [9/16] %v561, 128
        %641 = vxpose.xlu0.b32.cont [10/16] %v566, 128
        %642 = vxpose.xlu0.b32.cont [11/16] %v571, 128
        %643 = vxpose.xlu0.b32.cont [12/16] %v576, 128
        %644 = vxpose.xlu0.b32.cont [13/16] %v581, 128
        %645 = vxpose.xlu0.b32.cont [14/16] %v586, 128
        %646 = vxpose.xlu0.b32.cont [15/16] %v591, 128
        %647 = vxpose.xlu0.b32.end [16/16] %v596, 128
        %v648 = vpop.trf.xlu0
        %v649 = vpop.trf.xlu0
        %v650 = vpop.trf.xlu0
        %v651 = vpop.trf.xlu0
        %v652 = vpop.trf.xlu0
        %v653 = vpop.trf.xlu0
        %v654 = vpop.trf.xlu0
        %v655 = vpop.trf.xlu0
        %v656 = vpop.trf.xlu0
        %v657 = vpop.trf.xlu0
        %v658 = vpop.trf.xlu0
        %v659 = vpop.trf.xlu0
        %v660 = vpop.trf.xlu0
        %v661 = vpop.trf.xlu0
        %v662 = vpop.trf.xlu0
        %v663 = vpop.trf.xlu0
        %s664 = scalar_lea.vmem %s256, 4 [#allocation8]
        %665 = vst [vmem:[%s664] sm:$0xf] %v648
        %s666 = sand.u32 %s127, 1
        %s667 = scalar_lea.sflag [#allocation5], %s666
        %s668 = sand.u32 %s127, 1
        %s669 = smul.addr %s668, 8
        %s670 = scalar_lea.vmem [#allocation8], %s669
        // Predicated region
        $region45: #{tpu_custom_call.1} parent=35 // pred_check
          %p671 = pneg %p137
        $region46: #{tpu_custom_call.1} parent=35 // pred_check_branch
          %673 = sbr.rel (%p671) target = $region48
        $region47: #{tpu_custom_call.1} parent=35 // pred_region
          %s675 = ssub.s32 128, 128
          %676 = vsyncadd %s667, %s675
          %s677 = smul.addr %s25, 64
          %s678 = scalar_lea.hbm %s4, %s677
          %s679 = sshll.u32 %s670, 4
          %s680 = int_to_ptr.vmem [resolvable:$true] %s679
          %685 = dma.vmem_to_hbm [thread:$0]  %s680, 128, %s678, %s667, 64, 128, 4
        $region48: #{tpu_custom_call.1} parent=35 // pred_fallthru
          _
      $region36: #{tpu_custom_call.1} parent=5 // pred_fallthru
        _
      %p686 = scmp.le.s32.totalorder 2, %s20
      // Predicated region
      $region49: #{tpu_custom_call.1} parent=5 // pred_check
        %p687 = pneg %p686
      $region50: #{tpu_custom_call.1} parent=5 // pred_check_branch
        %689 = sbr.rel (%p687) target = $region52
      $region51: #{tpu_custom_call.1} parent=5 // pred_region
        %s690 = ssub.s32 %s20, 2
        // Predicated region
        $region53: #{tpu_custom_call.1} parent=51 // pred_check
          %p691 = pneg %p143
        $region54: #{tpu_custom_call.1} parent=51 // pred_check_branch
          %693 = sbr.rel (%p691) target = $region56
        $region55: #{tpu_custom_call.1} parent=51 // pred_region
          %s694 = sand.u32 %s128, 1
          %s695 = scalar_lea.sflag [#allocation5], %s694
          %s696 = sand.u32 %s128, 1
          %s697 = smul.addr %s696, 8
          %s698 = scalar_lea.vmem [#allocation8], %s697
          %699 = dma.done %s695, 128
        $region56: #{tpu_custom_call.1} parent=51 // pred_fallthru
          _
      $region52: #{tpu_custom_call.1} parent=5 // pred_fallthru
        _
    $region6: #{tpu_custom_call.1} parent=1 // loop_footer
      %s24 = sadd.s32 1, %s20
    $region7: #{tpu_custom_call.1} parent=1 // loop_footer_branch
      %19 = sbr.rel target = $region3
    $region8: #{tpu_custom_call.1} parent=1 // loop_exit
      _
    %700 = vsyncpa [#allocation4], 1
    %s701 = scalar_lea.sflag [#allocation4], 1
    %702 = vsyncpa %s701, 1
    %703 = vsyncpa [#allocation7], 1
    %s704 = scalar_lea.sflag [#allocation7], 1
    %705 = vsyncpa %s704, 1
    %706 = vsyncpa [#allocation5], 1
    %s707 = scalar_lea.sflag [#allocation5], 1
    %708 = vsyncpa %s707, 1

</llo_original>
